<compile_context>
chip_gen: v7x
topology: tpu7x:2x2x1
jax: 0.10.0
libtpu: 0.0.40
codegen_flags: <defaults>
</compile_context>

<pallas_src>
import jax
import jax.numpy as jnp
from jax.experimental import pallas as pl
from jax.experimental.pallas import tpu as pltpu

# ---------------- synthetic model dimensions ----------------
B, N = 2, 2          # batch, num cameras
C_IN = 3             # image channels
H = W = 16           # image spatial size (synthetic backbone keeps resolution)
HW = H * W           # pixels per camera -> lane axis inside the kernel
C_BACK = 16          # backbone output channels
C_FEAT = 32          # neck output channels (vtransform input feature channels)
C_DEPTH_IN = 1       # raw depth channels
C_DTRANS = 8         # dtransform output channels
D_BINS = 16          # number of depth bins  (vtransform.D)
C_OUT = 24           # camera feature channels (vtransform.C)


# --------------- fused camera kernel (one camera frame per grid step) --------
def camera_kernel(img_ref, d_ref,
                  w1_ref, b1_ref, w2_ref, b2_ref,
                  wd_ref, bd_ref,
                  wnd_d_ref, wnd_f_ref, bnd_ref,
                  wnf_d_ref, wnf_f_ref, bnf_ref,
                  feat_ref, depth_ref):
    # Lane-dense layout: channels on sublanes, the HW pixels of this camera on lanes.
    x = img_ref[...].astype(jnp.bfloat16)                       # (C_IN, HW)

    # backbone: 1x1 conv + ReLU  (W^T @ X, output stays lane-dense)
    h = jnp.dot(w1_ref[...], x, preferred_element_type=jnp.float32) + b1_ref[...]
    h = jnp.maximum(h, 0.0)                                      # (C_BACK, HW)

    # neck: 1x1 conv
    f = jnp.dot(w2_ref[...], h.astype(jnp.bfloat16),
                preferred_element_type=jnp.float32) + b2_ref[...]  # (C_FEAT, HW)

    # dtransform: (1 -> C_DTRANS) 1x1 conv + ReLU.  K=1 matmul is an outer
    # product -> do it on the VPU as a broadcast multiply, keep the MXU free.
    d = d_ref[...]                                               # (1, HW) f32
    dh = jnp.maximum(wd_ref[...] * d + bd_ref[...], 0.0)         # (C_DTRANS, HW)

    # depthnet on concat([dh, f], channel): weights are pre-split by input block
    # (d / feat) and by output block (depth bins / camera features), which is
    # mathematically identical to concat-then-matmul but needs no slab slicing.
    dh_b = dh.astype(jnp.bfloat16)
    f_b = f.astype(jnp.bfloat16)
    xd = (jnp.dot(wnd_d_ref[...], dh_b, preferred_element_type=jnp.float32)
          + jnp.dot(wnd_f_ref[...], f_b, preferred_element_type=jnp.float32)
          + bnd_ref[...])                                        # (D_BINS, HW)
    xf = (jnp.dot(wnf_d_ref[...], dh_b, preferred_element_type=jnp.float32)
          + jnp.dot(wnf_f_ref[...], f_b, preferred_element_type=jnp.float32)
          + bnf_ref[...])                                        # (C_OUT, HW)

    # depth = softmax over depth bins (per pixel), f32, max-subtracted
    m = jnp.max(xd, axis=0, keepdims=True)
    e = jnp.exp(xd - m)
    s = jnp.sum(e, axis=0, keepdims=True)
    depth_ref[...] = e / s                                       # (D_BINS, HW) == NCHW slice
    feat_ref[...] = xf                                           # (C_OUT, HW)


# ---------------- pallas_call wrapper ----------------
def _const_spec(shape):
    # whole-array block, constant block index (tiny weights/biases, fetched once)
    return pl.BlockSpec(shape, lambda b: (0,) * len(shape))


def run_camera(img3, d3, p):
    bn, _, hw = img3.shape
    return pl.pallas_call(
        camera_kernel,
        out_shape=(
            jax.ShapeDtypeStruct((bn, C_OUT, hw), jnp.float32),
            jax.ShapeDtypeStruct((bn, D_BINS, hw), jnp.float32),
        ),
        grid=(bn,),
        in_specs=[
            pl.BlockSpec((None, C_IN, hw), lambda b: (b, 0, 0)),
            pl.BlockSpec((None, C_DEPTH_IN, hw), lambda b: (b, 0, 0)),
            _const_spec(p["w1"].shape), _const_spec(p["b1"].shape),
            _const_spec(p["w2"].shape), _const_spec(p["b2"].shape),
            _const_spec(p["wd"].shape), _const_spec(p["bd"].shape),
            _const_spec(p["wnd_d"].shape), _const_spec(p["wnd_f"].shape),
            _const_spec(p["bnd"].shape),
            _const_spec(p["wnf_d"].shape), _const_spec(p["wnf_f"].shape),
            _const_spec(p["bnf"].shape),
        ],
        out_specs=(
            pl.BlockSpec((None, C_OUT, hw), lambda b: (b, 0, 0)),
            pl.BlockSpec((None, D_BINS, hw), lambda b: (b, 0, 0)),
        ),
        compiler_params=pltpu.CompilerParams(dimension_semantics=("parallel",)),
    )(img3, d3,
      p["w1"], p["b1"], p["w2"], p["b2"],
      p["wd"], p["bd"],
      p["wnd_d"], p["wnd_f"], p["bnd"],
      p["wnf_d"], p["wnf_f"], p["bnf"])


@jax.jit
def camera_module_forward(img, depth, params):
    # img:   (B, N, C_IN, H, W)   NCHW per camera (PyTorch convention)
    # depth: (B, N, 1,    H, W)
    b, n, c, h, w = img.shape
    bn = b * n
    hw = h * w

    # img.view(B*N, C, H, W): NCHW -> (BN, C, HW) is a PURE reshape; inside the
    # kernel channels land on sublanes and the HW pixels of a camera on lanes.
    img3 = img.reshape(bn, c, hw)
    d3 = depth.reshape(bn, C_DEPTH_IN, hw)

    feat3, depth3 = run_camera(img3, d3, params)

    fh, fw = h, w  # synthetic 1x1 backbone/neck keep resolution
    # feat = x[:, D:D+C].permute(0, 2, 3, 1) -> (BN, fH, fW, C_OUT)
    feat_out = feat3.reshape(bn, C_OUT, fh, fw).transpose(0, 2, 3, 1)
    # depth = x[:, :D].softmax(dim=1)        -> (BN, D, fH, fW): the lane-dense
    # kernel output is already channel-major, so this is reshape-only.
    depth_out = depth3.reshape(bn, D_BINS, fh, fw)
    return feat_out, depth_out


def init_params(key):
    ks = jax.random.split(key, 10)

    def p(k, shape, dtype=jnp.float32, scale=0.1):
        return (scale * jax.random.normal(k, shape)).astype(dtype)

    bf = jnp.bfloat16
    return {
        # backbone 1x1 conv (C_IN -> C_BACK) + ReLU      [stored as (C_out, C_in)]
        "w1": p(ks[0], (C_BACK, C_IN), bf),
        "b1": p(ks[1], (C_BACK, 1)),
        # neck 1x1 conv (C_BACK -> C_FEAT)
        "w2": p(ks[2], (C_FEAT, C_BACK), bf),
        "b2": p(ks[3], (C_FEAT, 1)),
        # dtransform 1x1 conv (1 -> C_DTRANS) + ReLU     (VPU outer-product path)
        "wd": p(ks[4], (C_DTRANS, 1)),
        "bd": p(ks[5], (C_DTRANS, 1)),
        # depthnet 1x1 conv ((C_DTRANS + C_FEAT) -> D_BINS + C_OUT),
        # pre-split by input block (d / feat) and output block (depth / feat)
        "wnd_d": p(ks[6], (D_BINS, C_DTRANS), bf),
        "wnd_f": p(ks[7], (D_BINS, C_FEAT), bf),
        "bnd": p(ks[8], (D_BINS, 1)),
        "wnf_d": p(jax.random.fold_in(ks[9], 0), (C_OUT, C_DTRANS), bf),
        "wnf_f": p(jax.random.fold_in(ks[9], 1), (C_OUT, C_FEAT), bf),
        "bnf": p(jax.random.fold_in(ks[9], 2), (C_OUT, 1)),
    }


if __name__ == "__main__":
    key = jax.random.PRNGKey(0)
    k_img, k_depth, k_param = jax.random.split(key, 3)

    img = jax.random.normal(k_img, (B, N, C_IN, H, W), dtype=jnp.float32)
    depth_in = jax.random.normal(k_depth, (B, N, C_DEPTH_IN, H, W), dtype=jnp.float32)
    params = init_params(k_param)

    feat, depth = camera_module_forward(img, depth_in, params)
    jax.block_until_ready((feat, depth))

    assert feat.shape == (B * N, H, W, C_OUT), feat.shape
    assert depth.shape == (B * N, D_BINS, H, W), depth.shape
    # softmax over depth bins sums to 1 per pixel
    assert jnp.allclose(jnp.sum(depth, axis=1), 1.0, atol=1e-4)
    assert bool(jnp.all(jnp.isfinite(feat)))

    print("KERNEL_OK")
</pallas_src>

<mosaic_0001>
module attributes {stable_mosaic.version = 11 : i64} {
  func.func @camera_kernel(%arg0: i32, %arg1: memref<1x3x256xf32, #tpu.memory_space<vmem>>, %arg2: memref<1x1x256xf32, #tpu.memory_space<vmem>>, %arg3: memref<16x3xbf16, #tpu.memory_space<vmem>>, %arg4: memref<16x1xf32, #tpu.memory_space<vmem>>, %arg5: memref<32x16xbf16, #tpu.memory_space<vmem>>, %arg6: memref<32x1xf32, #tpu.memory_space<vmem>>, %arg7: memref<8x1xf32, #tpu.memory_space<vmem>>, %arg8: memref<8x1xf32, #tpu.memory_space<vmem>>, %arg9: memref<16x8xbf16, #tpu.memory_space<vmem>>, %arg10: memref<16x32xbf16, #tpu.memory_space<vmem>>, %arg11: memref<16x1xf32, #tpu.memory_space<vmem>>, %arg12: memref<24x8xbf16, #tpu.memory_space<vmem>>, %arg13: memref<24x32xbf16, #tpu.memory_space<vmem>>, %arg14: memref<24x1xf32, #tpu.memory_space<vmem>>, %arg15: memref<1x24x256xf32, #tpu.memory_space<vmem>>, %arg16: memref<1x16x256xf32, #tpu.memory_space<vmem>>) attributes {dimension_semantics = [#tpu.dimension_semantics<parallel>], iteration_bounds = array<i64: 4>, scalar_prefetch = 0 : i64, scratch_operands = 0 : i64, tpu.core_type = #tpu.core_type<tc>, window_params = [{transform_indices = @transform_0, window_bounds = array<i64: 1, 3, 256>}, {transform_indices = @transform_1, window_bounds = array<i64: 1, 1, 256>}, {pipeline_mode = #tpu.pipeline_mode<synchronous>, transform_indices = @transform_2, window_bounds = array<i64: 16, 3>}, {pipeline_mode = #tpu.pipeline_mode<synchronous>, transform_indices = @transform_3, window_bounds = array<i64: 16, 1>}, {pipeline_mode = #tpu.pipeline_mode<synchronous>, transform_indices = @transform_4, window_bounds = array<i64: 32, 16>}, {pipeline_mode = #tpu.pipeline_mode<synchronous>, transform_indices = @transform_5, window_bounds = array<i64: 32, 1>}, {pipeline_mode = #tpu.pipeline_mode<synchronous>, transform_indices = @transform_6, window_bounds = array<i64: 8, 1>}, {pipeline_mode = #tpu.pipeline_mode<synchronous>, transform_indices = @transform_7, window_bounds = array<i64: 8, 1>}, {pipeline_mode = #tpu.pipeline_mode<synchronous>, transform_indices = @transform_8, window_bounds = array<i64: 16, 8>}, {pipeline_mode = #tpu.pipeline_mode<synchronous>, transform_indices = @transform_9, window_bounds = array<i64: 16, 32>}, {pipeline_mode = #tpu.pipeline_mode<synchronous>, transform_indices = @transform_10, window_bounds = array<i64: 16, 1>}, {pipeline_mode = #tpu.pipeline_mode<synchronous>, transform_indices = @transform_11, window_bounds = array<i64: 24, 8>}, {pipeline_mode = #tpu.pipeline_mode<synchronous>, transform_indices = @transform_12, window_bounds = array<i64: 24, 32>}, {pipeline_mode = #tpu.pipeline_mode<synchronous>, transform_indices = @transform_13, window_bounds = array<i64: 24, 1>}, {transform_indices = @transform_14, window_bounds = array<i64: 1, 24, 256>}, {transform_indices = @transform_15, window_bounds = array<i64: 1, 16, 256>}]} {
    %c0 = arith.constant 0 : index
    %c0_0 = arith.constant 0 : index
    %c0_1 = arith.constant 0 : index
    %0 = vector.load %arg1[%c0, %c0_0, %c0_1] : memref<1x3x256xf32, #tpu.memory_space<vmem>>, vector<1x3x256xf32>
    %1 = vector.shape_cast %0 : vector<1x3x256xf32> to vector<3x256xf32>
    %2 = arith.truncf %1 : vector<3x256xf32> to vector<3x256xbf16>
    %c0_2 = arith.constant 0 : index
    %c0_3 = arith.constant 0 : index
    %3 = vector.load %arg3[%c0_2, %c0_3] : memref<16x3xbf16, #tpu.memory_space<vmem>>, vector<16x3xbf16>
    %cst = arith.constant dense<0.000000e+00> : vector<16x256xf32>
    %4 = tpu.matmul %3, %2, %cst {dimension_numbers = #tpu.dot_dimension_numbers<[1], [0], [0], [1], [0, 0, 1, 1], [], []>} : vector<16x3xbf16>, vector<3x256xbf16>, vector<16x256xf32> -> vector<16x256xf32>
    %c0_4 = arith.constant 0 : index
    %c0_5 = arith.constant 0 : index
    %5 = vector.load %arg4[%c0_4, %c0_5] : memref<16x1xf32, #tpu.memory_space<vmem>>, vector<16x1xf32>
    %6 = vector.broadcast %5 : vector<16x1xf32> to vector<16x256xf32>
    %7 = arith.addf %4, %6 : vector<16x256xf32>
    %cst_6 = arith.constant 0.000000e+00 : f32
    %8 = vector.broadcast %cst_6 : f32 to vector<16x256xf32>
    %9 = arith.maximumf %7, %8 : vector<16x256xf32>
    %c0_7 = arith.constant 0 : index
    %c0_8 = arith.constant 0 : index
    %10 = vector.load %arg5[%c0_7, %c0_8] : memref<32x16xbf16, #tpu.memory_space<vmem>>, vector<32x16xbf16>
    %11 = arith.truncf %9 : vector<16x256xf32> to vector<16x256xbf16>
    %cst_9 = arith.constant dense<0.000000e+00> : vector<32x256xf32>
    %12 = tpu.matmul %10, %11, %cst_9 {dimension_numbers = #tpu.dot_dimension_numbers<[1], [0], [0], [1], [0, 0, 1, 1], [], []>} : vector<32x16xbf16>, vector<16x256xbf16>, vector<32x256xf32> -> vector<32x256xf32>
    %c0_10 = arith.constant 0 : index
    %c0_11 = arith.constant 0 : index
    %13 = vector.load %arg6[%c0_10, %c0_11] : memref<32x1xf32, #tpu.memory_space<vmem>>, vector<32x1xf32>
    %14 = vector.broadcast %13 : vector<32x1xf32> to vector<32x256xf32>
    %15 = arith.addf %12, %14 : vector<32x256xf32>
    %c0_12 = arith.constant 0 : index
    %c0_13 = arith.constant 0 : index
    %c0_14 = arith.constant 0 : index
    %16 = vector.load %arg2[%c0_12, %c0_13, %c0_14] : memref<1x1x256xf32, #tpu.memory_space<vmem>>, vector<1x1x256xf32>
    %17 = vector.shape_cast %16 : vector<1x1x256xf32> to vector<1x256xf32>
    %c0_15 = arith.constant 0 : index
    %c0_16 = arith.constant 0 : index
    %18 = vector.load %arg7[%c0_15, %c0_16] : memref<8x1xf32, #tpu.memory_space<vmem>>, vector<8x1xf32>
    %19 = vector.broadcast %18 : vector<8x1xf32> to vector<8x256xf32>
    %20 = vector.broadcast %17 : vector<1x256xf32> to vector<8x256xf32>
    %21 = arith.mulf %19, %20 : vector<8x256xf32>
    %c0_17 = arith.constant 0 : index
    %c0_18 = arith.constant 0 : index
    %22 = vector.load %arg8[%c0_17, %c0_18] : memref<8x1xf32, #tpu.memory_space<vmem>>, vector<8x1xf32>
    %23 = vector.broadcast %22 : vector<8x1xf32> to vector<8x256xf32>
    %24 = arith.addf %21, %23 : vector<8x256xf32>
    %cst_19 = arith.constant 0.000000e+00 : f32
    %25 = vector.broadcast %cst_19 : f32 to vector<8x256xf32>
    %26 = arith.maximumf %24, %25 : vector<8x256xf32>
    %27 = arith.truncf %26 : vector<8x256xf32> to vector<8x256xbf16>
    %28 = arith.truncf %15 : vector<32x256xf32> to vector<32x256xbf16>
    %c0_20 = arith.constant 0 : index
    %c0_21 = arith.constant 0 : index
    %29 = vector.load %arg9[%c0_20, %c0_21] : memref<16x8xbf16, #tpu.memory_space<vmem>>, vector<16x8xbf16>
    %cst_22 = arith.constant dense<0.000000e+00> : vector<16x256xf32>
    %30 = tpu.matmul %29, %27, %cst_22 {dimension_numbers = #tpu.dot_dimension_numbers<[1], [0], [0], [1], [0, 0, 1, 1], [], []>} : vector<16x8xbf16>, vector<8x256xbf16>, vector<16x256xf32> -> vector<16x256xf32>
    %c0_23 = arith.constant 0 : index
    %c0_24 = arith.constant 0 : index
    %31 = vector.load %arg10[%c0_23, %c0_24] : memref<16x32xbf16, #tpu.memory_space<vmem>>, vector<16x32xbf16>
    %cst_25 = arith.constant dense<0.000000e+00> : vector<16x256xf32>
    %32 = tpu.matmul %31, %28, %cst_25 {dimension_numbers = #tpu.dot_dimension_numbers<[1], [0], [0], [1], [0, 0, 1, 1], [], []>} : vector<16x32xbf16>, vector<32x256xbf16>, vector<16x256xf32> -> vector<16x256xf32>
    %33 = arith.addf %30, %32 : vector<16x256xf32>
    %c0_26 = arith.constant 0 : index
    %c0_27 = arith.constant 0 : index
    %34 = vector.load %arg11[%c0_26, %c0_27] : memref<16x1xf32, #tpu.memory_space<vmem>>, vector<16x1xf32>
    %35 = vector.broadcast %34 : vector<16x1xf32> to vector<16x256xf32>
    %36 = arith.addf %33, %35 : vector<16x256xf32>
    %c0_28 = arith.constant 0 : index
    %c0_29 = arith.constant 0 : index
    %37 = vector.load %arg12[%c0_28, %c0_29] : memref<24x8xbf16, #tpu.memory_space<vmem>>, vector<24x8xbf16>
    %cst_30 = arith.constant dense<0.000000e+00> : vector<24x256xf32>
    %38 = tpu.matmul %37, %27, %cst_30 {dimension_numbers = #tpu.dot_dimension_numbers<[1], [0], [0], [1], [0, 0, 1, 1], [], []>} : vector<24x8xbf16>, vector<8x256xbf16>, vector<24x256xf32> -> vector<24x256xf32>
    %c0_31 = arith.constant 0 : index
    %c0_32 = arith.constant 0 : index
    %39 = vector.load %arg13[%c0_31, %c0_32] : memref<24x32xbf16, #tpu.memory_space<vmem>>, vector<24x32xbf16>
    %cst_33 = arith.constant dense<0.000000e+00> : vector<24x256xf32>
    %40 = tpu.matmul %39, %28, %cst_33 {dimension_numbers = #tpu.dot_dimension_numbers<[1], [0], [0], [1], [0, 0, 1, 1], [], []>} : vector<24x32xbf16>, vector<32x256xbf16>, vector<24x256xf32> -> vector<24x256xf32>
    %41 = arith.addf %38, %40 : vector<24x256xf32>
    %c0_34 = arith.constant 0 : index
    %c0_35 = arith.constant 0 : index
    %42 = vector.load %arg14[%c0_34, %c0_35] : memref<24x1xf32, #tpu.memory_space<vmem>>, vector<24x1xf32>
    %43 = vector.broadcast %42 : vector<24x1xf32> to vector<24x256xf32>
    %44 = arith.addf %41, %43 : vector<24x256xf32>
    %cst_36 = arith.constant dense<0xFF800000> : vector<256xf32>
    %45 = vector.multi_reduction <maximumf>, %36, %cst_36 [0] : vector<16x256xf32> to vector<256xf32>
    %46 = vector.shape_cast %45 : vector<256xf32> to vector<1x256xf32>
    %47 = vector.broadcast %46 : vector<1x256xf32> to vector<16x256xf32>
    %48 = arith.subf %36, %47 : vector<16x256xf32>
    %49 = math.exp %48 : vector<16x256xf32>
    %cst_37 = arith.constant dense<0.000000e+00> : vector<256xf32>
    %50 = vector.multi_reduction <add>, %49, %cst_37 [0] : vector<16x256xf32> to vector<256xf32>
    %51 = vector.shape_cast %50 : vector<256xf32> to vector<1x256xf32>
    %52 = vector.broadcast %51 : vector<1x256xf32> to vector<16x256xf32>
    %53 = arith.divf %49, %52 : vector<16x256xf32>
    %c0_38 = arith.constant 0 : index
    %c0_39 = arith.constant 0 : index
    %c0_40 = arith.constant 0 : index
    %54 = vector.load %arg16[%c0_38, %c0_39, %c0_40] : memref<1x16x256xf32, #tpu.memory_space<vmem>>, vector<1x16x256xf32>
    %55 = vector.shape_cast %54 : vector<1x16x256xf32> to vector<16x256xf32>
    %56 = vector.shape_cast %53 : vector<16x256xf32> to vector<1x16x256xf32>
    tpu.vector_store %arg16[%c0_38, %c0_39, %c0_40], %56 {strides = array<i32>} : memref<1x16x256xf32, #tpu.memory_space<vmem>>, vector<1x16x256xf32>,
    %c0_41 = arith.constant 0 : index
    %c0_42 = arith.constant 0 : index
    %c0_43 = arith.constant 0 : index
    %57 = vector.load %arg15[%c0_41, %c0_42, %c0_43] : memref<1x24x256xf32, #tpu.memory_space<vmem>>, vector<1x24x256xf32>
    %58 = vector.shape_cast %57 : vector<1x24x256xf32> to vector<24x256xf32>
    %59 = vector.shape_cast %44 : vector<24x256xf32> to vector<1x24x256xf32>
    tpu.vector_store %arg15[%c0_41, %c0_42, %c0_43], %59 {strides = array<i32>} : memref<1x24x256xf32, #tpu.memory_space<vmem>>, vector<1x24x256xf32>,
    return
  }
  func.func @transform_0(%arg0: i32) -> (i32, i32, i32) {
    %c0_i32 = arith.constant 0 : i32
    %c0_i32_0 = arith.constant 0 : i32
    %c0_i32_1 = arith.constant 0 : i32
    return %arg0, %c0_i32, %c0_i32_0 : i32, i32, i32
  }
  func.func @transform_1(%arg0: i32) -> (i32, i32, i32) {
    %c0_i32 = arith.constant 0 : i32
    %c0_i32_0 = arith.constant 0 : i32
    %c0_i32_1 = arith.constant 0 : i32
    return %arg0, %c0_i32, %c0_i32_0 : i32, i32, i32
  }
  func.func @transform_2(%arg0: i32) -> (i32, i32) {
    %c0_i32 = arith.constant 0 : i32
    %c0_i32_0 = arith.constant 0 : i32
    %c0_i32_1 = arith.constant 0 : i32
    return %c0_i32, %c0_i32_0 : i32, i32
  }
  func.func @transform_3(%arg0: i32) -> (i32, i32) {
    %c0_i32 = arith.constant 0 : i32
    %c0_i32_0 = arith.constant 0 : i32
    %c0_i32_1 = arith.constant 0 : i32
    return %c0_i32, %c0_i32_0 : i32, i32
  }
  func.func @transform_4(%arg0: i32) -> (i32, i32) {
    %c0_i32 = arith.constant 0 : i32
    %c0_i32_0 = arith.constant 0 : i32
    %c0_i32_1 = arith.constant 0 : i32
    return %c0_i32, %c0_i32_0 : i32, i32
  }
  func.func @transform_5(%arg0: i32) -> (i32, i32) {
    %c0_i32 = arith.constant 0 : i32
    %c0_i32_0 = arith.constant 0 : i32
    %c0_i32_1 = arith.constant 0 : i32
    return %c0_i32, %c0_i32_0 : i32, i32
  }
  func.func @transform_6(%arg0: i32) -> (i32, i32) {
    %c0_i32 = arith.constant 0 : i32
    %c0_i32_0 = arith.constant 0 : i32
    %c0_i32_1 = arith.constant 0 : i32
    return %c0_i32, %c0_i32_0 : i32, i32
  }
  func.func @transform_7(%arg0: i32) -> (i32, i32) {
    %c0_i32 = arith.constant 0 : i32
    %c0_i32_0 = arith.constant 0 : i32
    %c0_i32_1 = arith.constant 0 : i32
    return %c0_i32, %c0_i32_0 : i32, i32
  }
  func.func @transform_8(%arg0: i32) -> (i32, i32) {
    %c0_i32 = arith.constant 0 : i32
    %c0_i32_0 = arith.constant 0 : i32
    %c0_i32_1 = arith.constant 0 : i32
    return %c0_i32, %c0_i32_0 : i32, i32
  }
  func.func @transform_9(%arg0: i32) -> (i32, i32) {
    %c0_i32 = arith.constant 0 : i32
    %c0_i32_0 = arith.constant 0 : i32
    %c0_i32_1 = arith.constant 0 : i32
    return %c0_i32, %c0_i32_0 : i32, i32
  }
  func.func @transform_10(%arg0: i32) -> (i32, i32) {
    %c0_i32 = arith.constant 0 : i32
    %c0_i32_0 = arith.constant 0 : i32
    %c0_i32_1 = arith.constant 0 : i32
    return %c0_i32, %c0_i32_0 : i32, i32
  }
  func.func @transform_11(%arg0: i32) -> (i32, i32) {
    %c0_i32 = arith.constant 0 : i32
    %c0_i32_0 = arith.constant 0 : i32
    %c0_i32_1 = arith.constant 0 : i32
    return %c0_i32, %c0_i32_0 : i32, i32
  }
  func.func @transform_12(%arg0: i32) -> (i32, i32) {
    %c0_i32 = arith.constant 0 : i32
    %c0_i32_0 = arith.constant 0 : i32
    %c0_i32_1 = arith.constant 0 : i32
    return %c0_i32, %c0_i32_0 : i32, i32
  }
  func.func @transform_13(%arg0: i32) -> (i32, i32) {
    %c0_i32 = arith.constant 0 : i32
    %c0_i32_0 = arith.constant 0 : i32
    %c0_i32_1 = arith.constant 0 : i32
    return %c0_i32, %c0_i32_0 : i32, i32
  }
  func.func @transform_14(%arg0: i32) -> (i32, i32, i32) {
    %c0_i32 = arith.constant 0 : i32
    %c0_i32_0 = arith.constant 0 : i32
    %c0_i32_1 = arith.constant 0 : i32
    return %arg0, %c0_i32, %c0_i32_0 : i32, i32, i32
  }
  func.func @transform_15(%arg0: i32) -> (i32, i32, i32) {
    %c0_i32 = arith.constant 0 : i32
    %c0_i32_0 = arith.constant 0 : i32
    %c0_i32_1 = arith.constant 0 : i32
    return %arg0, %c0_i32, %c0_i32_0 : i32, i32, i32
  }
}

</mosaic_0001>

<llo_original>
// kernel: camera_module_forward.1
$region0: #{camera_module_forward.1}
  #allocation0 [shape = 'u32[]', space=smem, size = 0x4, offset = 0x4, fixed_abs, tag = 'smem constant byte address 0x4 - core index']
  #allocation1 [shape = 'u32[144,128]{1,0:T(1,128)}', space=vmem, size = 0x12000, scoped, tag = 'internal scratch']
  %s0 = inlined_call_operand.vmem [shape: f32[4,3,256], index: 0, kind: input, shape index: {}]
  %s1 = inlined_call_operand.vmem [shape: f32[4,1,256], index: 1, kind: input, shape index: {}]
  %s2 = inlined_call_operand.vmem [shape: bf16[16,3], index: 2, kind: input, shape index: {}]
  %s3 = inlined_call_operand.vmem [shape: f32[16,1], index: 3, kind: input, shape index: {}]
  %s4 = inlined_call_operand.vmem [shape: bf16[32,16], index: 4, kind: input, shape index: {}]
  %s5 = inlined_call_operand.vmem [shape: f32[32,1], index: 5, kind: input, shape index: {}]
  %s6 = inlined_call_operand.vmem [shape: f32[8,1], index: 6, kind: input, shape index: {}]
  %s7 = inlined_call_operand.vmem [shape: f32[8,1], index: 7, kind: input, shape index: {}]
  %s8 = inlined_call_operand.vmem [shape: bf16[16,8], index: 8, kind: input, shape index: {}]
  %s9 = inlined_call_operand.vmem [shape: bf16[16,32], index: 9, kind: input, shape index: {}]
  %s10 = inlined_call_operand.vmem [shape: f32[16,1], index: 10, kind: input, shape index: {}]
  %s11 = inlined_call_operand.vmem [shape: bf16[24,8], index: 11, kind: input, shape index: {}]
  %s12 = inlined_call_operand.vmem [shape: bf16[24,32], index: 12, kind: input, shape index: {}]
  %s13 = inlined_call_operand.vmem [shape: f32[24,1], index: 13, kind: input, shape index: {}]
  %s14 = inlined_call_operand.vmem [shape: f32[4,24,256], index: 14, kind: output, shape index: {0}]
  %s15 = inlined_call_operand.vmem [shape: f32[4,16,256], index: 15, kind: output, shape index: {1}]
  %16 = xla_tuple %s14, %s15
  %s17 = sld [smem:[#allocation0]]
  $region97: #{camera_module_forward.1} parent=0
    _
  %s19 = ssub.s32 1, %s17
  %s20 = scalar_select 0, %s19, %s17
  loop: start=0, step=1, limit=6
  $region2: #{camera_module_forward.1} parent=0 // loop_pre_header
    _
  $region3: #{camera_module_forward.1} parent=0 // loop_header
    %s22 = sphi 0, %s26
    %p23 = scmp.ge.s32.totalorder %s22, 6
    %s32 = sphi 0, %s34
    %s35 = sphi 0, %s32
    %s36 = sphi 0, %s35
    %s52 = sphi 0, %s36
    %s58 = sphi 0, %s60
    %s61 = sphi 0, %s58
    %s62 = sphi 0, %s61
    %s78 = sphi 0, %s62
    %s82 = sphi 0, %s82
    %s84 = sphi 0, %s82
    %s85 = sphi 0, %s84
    %s99 = sphi 0, %s85
    %s103 = sphi 0, %s103
    %s105 = sphi 0, %s103
    %s106 = sphi 0, %s105
    %s120 = sphi 0, %s106
    %s124 = sphi 0, %s124
    %s126 = sphi 0, %s124
    %s127 = sphi 0, %s126
    %s141 = sphi 0, %s127
    %s145 = sphi 0, %s145
    %s147 = sphi 0, %s145
    %s148 = sphi 0, %s147
    %s162 = sphi 0, %s148
    %s166 = sphi 0, %s166
    %s168 = sphi 0, %s166
    %s169 = sphi 0, %s168
    %s183 = sphi 0, %s169
    %s187 = sphi 0, %s187
    %s189 = sphi 0, %s187
    %s190 = sphi 0, %s189
    %s204 = sphi 0, %s190
    %s208 = sphi 0, %s208
    %s210 = sphi 0, %s208
    %s211 = sphi 0, %s210
    %s225 = sphi 0, %s211
    %s229 = sphi 0, %s229
    %s231 = sphi 0, %s229
    %s232 = sphi 0, %s231
    %s246 = sphi 0, %s232
    %s250 = sphi 0, %s250
    %s252 = sphi 0, %s250
    %s253 = sphi 0, %s252
    %s267 = sphi 0, %s253
    %s271 = sphi 0, %s271
    %s273 = sphi 0, %s271
    %s274 = sphi 0, %s273
    %s288 = sphi 0, %s274
    %s292 = sphi 0, %s292
    %s294 = sphi 0, %s292
    %s295 = sphi 0, %s294
    %s309 = sphi 0, %s295
    %s313 = sphi 0, %s313
    %s315 = sphi 0, %s313
    %s316 = sphi 0, %s315
    %s330 = sphi 0, %s316
    %s336 = sphi 0, %s338
    %s339 = sphi 0, %s336
    %s340 = sphi 0, %s339
    %s356 = sphi 0, %s340
    %s362 = sphi 0, %s364
    %s365 = sphi 0, %s362
    %s366 = sphi 0, %s365
    %s382 = sphi 0, %s366
  $region4: #{camera_module_forward.1} parent=0 // loop_header_branch
    %25 = sbr.rel (%p23) target = $region8
  $region5: #{camera_module_forward.1} parent=0 // loop_body
    %s27 = ssub.s32 %s22, 1
    %s28 = ssub.s32 %s22, 2
    %s29 = sadd.s32 %s22, 1
    %s30 = ssub.s32 %s22, %s29
    %p31 = scmp.eq.s32.totalorder %s30, 0
    %s33 = sadd.s32 %s32, 1
    %s34 = scalar_select %p31, %s32, %s33
    %p37 = pneg %p31
    %p38 = scmp.eq.s32.totalorder %s22, 3
    %p39 = por %p37, %p38
    %p40 = scmp.ne.s32.totalorder %s32, %s35
    %p41 = scmp.eq.s32.totalorder %s22, 0
    %p42 = por %p40, %p41
    %p43 = scmp.ne.s32.totalorder %s32, %s35
    %p44 = scmp.eq.s32.totalorder %s27, 3
    %p45 = por %p43, %p44
    %p46 = scmp.ne.s32.totalorder %s35, %s36
    %p47 = scmp.eq.s32.totalorder %s27, 0
    %p48 = por %p46, %p47
    %p49 = scmp.ne.s32.totalorder %s35, %s36
    %p50 = scmp.eq.s32.totalorder %s28, 3
    %p51 = por %p49, %p50
    %p53 = scmp.ne.s32.totalorder %s36, %s52
    %p54 = scmp.eq.s32.totalorder %s28, 0
    %p55 = por %p53, %p54
    %s56 = ssub.s32 %s22, %s29
    %p57 = scmp.eq.s32.totalorder %s56, 0
    %s59 = sadd.s32 %s58, 1
    %s60 = scalar_select %p57, %s58, %s59
    %p63 = pneg %p57
    %p64 = scmp.eq.s32.totalorder %s22, 3
    %p65 = por %p63, %p64
    %p66 = scmp.ne.s32.totalorder %s58, %s61
    %p67 = scmp.eq.s32.totalorder %s22, 0
    %p68 = por %p66, %p67
    %p69 = scmp.ne.s32.totalorder %s58, %s61
    %p70 = scmp.eq.s32.totalorder %s27, 3
    %p71 = por %p69, %p70
    %p72 = scmp.ne.s32.totalorder %s61, %s62
    %p73 = scmp.eq.s32.totalorder %s27, 0
    %p74 = por %p72, %p73
    %p75 = scmp.ne.s32.totalorder %s61, %s62
    %p76 = scmp.eq.s32.totalorder %s28, 3
    %p77 = por %p75, %p76
    %p79 = scmp.ne.s32.totalorder %s62, %s78
    %p80 = scmp.eq.s32.totalorder %s28, 0
    %p81 = por %p79, %p80
    %s83 = sadd.s32 %s82, 1
    %p86 = scmp.eq.s32.totalorder %s22, 3
    %p87 = scmp.ne.s32.totalorder %s82, %s84
    %p88 = scmp.eq.s32.totalorder %s22, 0
    %p89 = por %p87, %p88
    %p90 = scmp.ne.s32.totalorder %s82, %s84
    %p91 = scmp.eq.s32.totalorder %s27, 3
    %p92 = por %p90, %p91
    %p93 = scmp.ne.s32.totalorder %s84, %s85
    %p94 = scmp.eq.s32.totalorder %s27, 0
    %p95 = por %p93, %p94
    %p96 = scmp.ne.s32.totalorder %s84, %s85
    %p97 = scmp.eq.s32.totalorder %s28, 3
    %p98 = por %p96, %p97
    %p100 = scmp.ne.s32.totalorder %s85, %s99
    %p101 = scmp.eq.s32.totalorder %s28, 0
    %p102 = por %p100, %p101
    %s104 = sadd.s32 %s103, 1
    %p107 = scmp.eq.s32.totalorder %s22, 3
    %p108 = scmp.ne.s32.totalorder %s103, %s105
    %p109 = scmp.eq.s32.totalorder %s22, 0
    %p110 = por %p108, %p109
    %p111 = scmp.ne.s32.totalorder %s103, %s105
    %p112 = scmp.eq.s32.totalorder %s27, 3
    %p113 = por %p111, %p112
    %p114 = scmp.ne.s32.totalorder %s105, %s106
    %p115 = scmp.eq.s32.totalorder %s27, 0
    %p116 = por %p114, %p115
    %p117 = scmp.ne.s32.totalorder %s105, %s106
    %p118 = scmp.eq.s32.totalorder %s28, 3
    %p119 = por %p117, %p118
    %p121 = scmp.ne.s32.totalorder %s106, %s120
    %p122 = scmp.eq.s32.totalorder %s28, 0
    %p123 = por %p121, %p122
    %s125 = sadd.s32 %s124, 1
    %p128 = scmp.eq.s32.totalorder %s22, 3
    %p129 = scmp.ne.s32.totalorder %s124, %s126
    %p130 = scmp.eq.s32.totalorder %s22, 0
    %p131 = por %p129, %p130
    %p132 = scmp.ne.s32.totalorder %s124, %s126
    %p133 = scmp.eq.s32.totalorder %s27, 3
    %p134 = por %p132, %p133
    %p135 = scmp.ne.s32.totalorder %s126, %s127
    %p136 = scmp.eq.s32.totalorder %s27, 0
    %p137 = por %p135, %p136
    %p138 = scmp.ne.s32.totalorder %s126, %s127
    %p139 = scmp.eq.s32.totalorder %s28, 3
    %p140 = por %p138, %p139
    %p142 = scmp.ne.s32.totalorder %s127, %s141
    %p143 = scmp.eq.s32.totalorder %s28, 0
    %p144 = por %p142, %p143
    %s146 = sadd.s32 %s145, 1
    %p149 = scmp.eq.s32.totalorder %s22, 3
    %p150 = scmp.ne.s32.totalorder %s145, %s147
    %p151 = scmp.eq.s32.totalorder %s22, 0
    %p152 = por %p150, %p151
    %p153 = scmp.ne.s32.totalorder %s145, %s147
    %p154 = scmp.eq.s32.totalorder %s27, 3
    %p155 = por %p153, %p154
    %p156 = scmp.ne.s32.totalorder %s147, %s148
    %p157 = scmp.eq.s32.totalorder %s27, 0
    %p158 = por %p156, %p157
    %p159 = scmp.ne.s32.totalorder %s147, %s148
    %p160 = scmp.eq.s32.totalorder %s28, 3
    %p161 = por %p159, %p160
    %p163 = scmp.ne.s32.totalorder %s148, %s162
    %p164 = scmp.eq.s32.totalorder %s28, 0
    %p165 = por %p163, %p164
    %s167 = sadd.s32 %s166, 1
    %p170 = scmp.eq.s32.totalorder %s22, 3
    %p171 = scmp.ne.s32.totalorder %s166, %s168
    %p172 = scmp.eq.s32.totalorder %s22, 0
    %p173 = por %p171, %p172
    %p174 = scmp.ne.s32.totalorder %s166, %s168
    %p175 = scmp.eq.s32.totalorder %s27, 3
    %p176 = por %p174, %p175
    %p177 = scmp.ne.s32.totalorder %s168, %s169
    %p178 = scmp.eq.s32.totalorder %s27, 0
    %p179 = por %p177, %p178
    %p180 = scmp.ne.s32.totalorder %s168, %s169
    %p181 = scmp.eq.s32.totalorder %s28, 3
    %p182 = por %p180, %p181
    %p184 = scmp.ne.s32.totalorder %s169, %s183
    %p185 = scmp.eq.s32.totalorder %s28, 0
    %p186 = por %p184, %p185
    %s188 = sadd.s32 %s187, 1
    %p191 = scmp.eq.s32.totalorder %s22, 3
    %p192 = scmp.ne.s32.totalorder %s187, %s189
    %p193 = scmp.eq.s32.totalorder %s22, 0
    %p194 = por %p192, %p193
    %p195 = scmp.ne.s32.totalorder %s187, %s189
    %p196 = scmp.eq.s32.totalorder %s27, 3
    %p197 = por %p195, %p196
    %p198 = scmp.ne.s32.totalorder %s189, %s190
    %p199 = scmp.eq.s32.totalorder %s27, 0
    %p200 = por %p198, %p199
    %p201 = scmp.ne.s32.totalorder %s189, %s190
    %p202 = scmp.eq.s32.totalorder %s28, 3
    %p203 = por %p201, %p202
    %p205 = scmp.ne.s32.totalorder %s190, %s204
    %p206 = scmp.eq.s32.totalorder %s28, 0
    %p207 = por %p205, %p206
    %s209 = sadd.s32 %s208, 1
    %p212 = scmp.eq.s32.totalorder %s22, 3
    %p213 = scmp.ne.s32.totalorder %s208, %s210
    %p214 = scmp.eq.s32.totalorder %s22, 0
    %p215 = por %p213, %p214
    %p216 = scmp.ne.s32.totalorder %s208, %s210
    %p217 = scmp.eq.s32.totalorder %s27, 3
    %p218 = por %p216, %p217
    %p219 = scmp.ne.s32.totalorder %s210, %s211
    %p220 = scmp.eq.s32.totalorder %s27, 0
    %p221 = por %p219, %p220
    %p222 = scmp.ne.s32.totalorder %s210, %s211
    %p223 = scmp.eq.s32.totalorder %s28, 3
    %p224 = por %p222, %p223
    %p226 = scmp.ne.s32.totalorder %s211, %s225
    %p227 = scmp.eq.s32.totalorder %s28, 0
    %p228 = por %p226, %p227
    %s230 = sadd.s32 %s229, 1
    %p233 = scmp.eq.s32.totalorder %s22, 3
    %p234 = scmp.ne.s32.totalorder %s229, %s231
    %p235 = scmp.eq.s32.totalorder %s22, 0
    %p236 = por %p234, %p235
    %p237 = scmp.ne.s32.totalorder %s229, %s231
    %p238 = scmp.eq.s32.totalorder %s27, 3
    %p239 = por %p237, %p238
    %p240 = scmp.ne.s32.totalorder %s231, %s232
    %p241 = scmp.eq.s32.totalorder %s27, 0
    %p242 = por %p240, %p241
    %p243 = scmp.ne.s32.totalorder %s231, %s232
    %p244 = scmp.eq.s32.totalorder %s28, 3
    %p245 = por %p243, %p244
    %p247 = scmp.ne.s32.totalorder %s232, %s246
    %p248 = scmp.eq.s32.totalorder %s28, 0
    %p249 = por %p247, %p248
    %s251 = sadd.s32 %s250, 1
    %p254 = scmp.eq.s32.totalorder %s22, 3
    %p255 = scmp.ne.s32.totalorder %s250, %s252
    %p256 = scmp.eq.s32.totalorder %s22, 0
    %p257 = por %p255, %p256
    %p258 = scmp.ne.s32.totalorder %s250, %s252
    %p259 = scmp.eq.s32.totalorder %s27, 3
    %p260 = por %p258, %p259
    %p261 = scmp.ne.s32.totalorder %s252, %s253
    %p262 = scmp.eq.s32.totalorder %s27, 0
    %p263 = por %p261, %p262
    %p264 = scmp.ne.s32.totalorder %s252, %s253
    %p265 = scmp.eq.s32.totalorder %s28, 3
    %p266 = por %p264, %p265
    %p268 = scmp.ne.s32.totalorder %s253, %s267
    %p269 = scmp.eq.s32.totalorder %s28, 0
    %p270 = por %p268, %p269
    %s272 = sadd.s32 %s271, 1
    %p275 = scmp.eq.s32.totalorder %s22, 3
    %p276 = scmp.ne.s32.totalorder %s271, %s273
    %p277 = scmp.eq.s32.totalorder %s22, 0
    %p278 = por %p276, %p277
    %p279 = scmp.ne.s32.totalorder %s271, %s273
    %p280 = scmp.eq.s32.totalorder %s27, 3
    %p281 = por %p279, %p280
    %p282 = scmp.ne.s32.totalorder %s273, %s274
    %p283 = scmp.eq.s32.totalorder %s27, 0
    %p284 = por %p282, %p283
    %p285 = scmp.ne.s32.totalorder %s273, %s274
    %p286 = scmp.eq.s32.totalorder %s28, 3
    %p287 = por %p285, %p286
    %p289 = scmp.ne.s32.totalorder %s274, %s288
    %p290 = scmp.eq.s32.totalorder %s28, 0
    %p291 = por %p289, %p290
    %s293 = sadd.s32 %s292, 1
    %p296 = scmp.eq.s32.totalorder %s22, 3
    %p297 = scmp.ne.s32.totalorder %s292, %s294
    %p298 = scmp.eq.s32.totalorder %s22, 0
    %p299 = por %p297, %p298
    %p300 = scmp.ne.s32.totalorder %s292, %s294
    %p301 = scmp.eq.s32.totalorder %s27, 3
    %p302 = por %p300, %p301
    %p303 = scmp.ne.s32.totalorder %s294, %s295
    %p304 = scmp.eq.s32.totalorder %s27, 0
    %p305 = por %p303, %p304
    %p306 = scmp.ne.s32.totalorder %s294, %s295
    %p307 = scmp.eq.s32.totalorder %s28, 3
    %p308 = por %p306, %p307
    %p310 = scmp.ne.s32.totalorder %s295, %s309
    %p311 = scmp.eq.s32.totalorder %s28, 0
    %p312 = por %p310, %p311
    %s314 = sadd.s32 %s313, 1
    %p317 = scmp.eq.s32.totalorder %s22, 3
    %p318 = scmp.ne.s32.totalorder %s313, %s315
    %p319 = scmp.eq.s32.totalorder %s22, 0
    %p320 = por %p318, %p319
    %p321 = scmp.ne.s32.totalorder %s313, %s315
    %p322 = scmp.eq.s32.totalorder %s27, 3
    %p323 = por %p321, %p322
    %p324 = scmp.ne.s32.totalorder %s315, %s316
    %p325 = scmp.eq.s32.totalorder %s27, 0
    %p326 = por %p324, %p325
    %p327 = scmp.ne.s32.totalorder %s315, %s316
    %p328 = scmp.eq.s32.totalorder %s28, 3
    %p329 = por %p327, %p328
    %p331 = scmp.ne.s32.totalorder %s316, %s330
    %p332 = scmp.eq.s32.totalorder %s28, 0
    %p333 = por %p331, %p332
    %s334 = ssub.s32 %s22, %s29
    %p335 = scmp.eq.s32.totalorder %s334, 0
    %s337 = sadd.s32 %s336, 1
    %s338 = scalar_select %p335, %s336, %s337
    %p341 = pneg %p335
    %p342 = scmp.eq.s32.totalorder %s22, 3
    %p343 = por %p341, %p342
    %p344 = scmp.ne.s32.totalorder %s336, %s339
    %p345 = scmp.eq.s32.totalorder %s22, 0
    %p346 = por %p344, %p345
    %p347 = scmp.ne.s32.totalorder %s336, %s339
    %p348 = scmp.eq.s32.totalorder %s27, 3
    %p349 = por %p347, %p348
    %p350 = scmp.ne.s32.totalorder %s339, %s340
    %p351 = scmp.eq.s32.totalorder %s27, 0
    %p352 = por %p350, %p351
    %p353 = scmp.ne.s32.totalorder %s339, %s340
    %p354 = scmp.eq.s32.totalorder %s28, 3
    %p355 = por %p353, %p354
    %p357 = scmp.ne.s32.totalorder %s340, %s356
    %p358 = scmp.eq.s32.totalorder %s28, 0
    %p359 = por %p357, %p358
    %s360 = ssub.s32 %s22, %s29
    %p361 = scmp.eq.s32.totalorder %s360, 0
    %s363 = sadd.s32 %s362, 1
    %s364 = scalar_select %p361, %s362, %s363
    %p367 = pneg %p361
    %p368 = scmp.eq.s32.totalorder %s22, 3
    %p369 = por %p367, %p368
    %p370 = scmp.ne.s32.totalorder %s362, %s365
    %p371 = scmp.eq.s32.totalorder %s22, 0
    %p372 = por %p370, %p371
    %p373 = scmp.ne.s32.totalorder %s362, %s365
    %p374 = scmp.eq.s32.totalorder %s27, 3
    %p375 = por %p373, %p374
    %p376 = scmp.ne.s32.totalorder %s365, %s366
    %p377 = scmp.eq.s32.totalorder %s27, 0
    %p378 = por %p376, %p377
    %p379 = scmp.ne.s32.totalorder %s365, %s366
    %p380 = scmp.eq.s32.totalorder %s28, 3
    %p381 = por %p379, %p380
    %p383 = scmp.ne.s32.totalorder %s366, %s382
    %p384 = scmp.eq.s32.totalorder %s28, 0
    %p385 = por %p383, %p384
    %p386 = scmp.le.s32.totalorder 1, %s22
    %p387 = scmp.lt.s32.totalorder %s22, 5
    %p388 = pnand %p386, %p387
    %p389 = pneg %p388
    // Predicated region
    $region9: #{camera_module_forward.1} parent=5 // pred_check
      _
    $region10: #{camera_module_forward.1} parent=5 // pred_check_branch
      %391 = sbr.rel (%p388) target = $region12
    $region11: #{camera_module_forward.1} parent=5 // pred_region
      %s392 = ssub.s32 %s22, 1
      // Predicated region
      $region13: #{camera_module_forward.1} parent=11 // pred_check
        %p393 = pneg %p95
      $region14: #{camera_module_forward.1} parent=11 // pred_check_branch
        %395 = sbr.rel (%p393) target = $region16
      $region15: #{camera_module_forward.1} parent=11 // pred_region
        _
      $region16: #{camera_module_forward.1} parent=11 // pred_fallthru
        _
      // Predicated region
      $region17: #{camera_module_forward.1} parent=11 // pred_check
        %p396 = pneg %p116
      $region18: #{camera_module_forward.1} parent=11 // pred_check_branch
        %398 = sbr.rel (%p396) target = $region20
      $region19: #{camera_module_forward.1} parent=11 // pred_region
        _
      $region20: #{camera_module_forward.1} parent=11 // pred_fallthru
        _
      // Predicated region
      $region21: #{camera_module_forward.1} parent=11 // pred_check
        %p399 = pneg %p137
      $region22: #{camera_module_forward.1} parent=11 // pred_check_branch
        %401 = sbr.rel (%p399) target = $region24
      $region23: #{camera_module_forward.1} parent=11 // pred_region
        _
      $region24: #{camera_module_forward.1} parent=11 // pred_fallthru
        _
      // Predicated region
      $region25: #{camera_module_forward.1} parent=11 // pred_check
        %p402 = pneg %p158
      $region26: #{camera_module_forward.1} parent=11 // pred_check_branch
        %404 = sbr.rel (%p402) target = $region28
      $region27: #{camera_module_forward.1} parent=11 // pred_region
        _
      $region28: #{camera_module_forward.1} parent=11 // pred_fallthru
        _
      // Predicated region
      $region29: #{camera_module_forward.1} parent=11 // pred_check
        %p405 = pneg %p179
      $region30: #{camera_module_forward.1} parent=11 // pred_check_branch
        %407 = sbr.rel (%p405) target = $region32
      $region31: #{camera_module_forward.1} parent=11 // pred_region
        _
      $region32: #{camera_module_forward.1} parent=11 // pred_fallthru
        _
      // Predicated region
      $region33: #{camera_module_forward.1} parent=11 // pred_check
        %p408 = pneg %p200
      $region34: #{camera_module_forward.1} parent=11 // pred_check_branch
        %410 = sbr.rel (%p408) target = $region36
      $region35: #{camera_module_forward.1} parent=11 // pred_region
        _
      $region36: #{camera_module_forward.1} parent=11 // pred_fallthru
        _
      // Predicated region
      $region37: #{camera_module_forward.1} parent=11 // pred_check
        %p411 = pneg %p221
      $region38: #{camera_module_forward.1} parent=11 // pred_check_branch
        %413 = sbr.rel (%p411) target = $region40
      $region39: #{camera_module_forward.1} parent=11 // pred_region
        _
      $region40: #{camera_module_forward.1} parent=11 // pred_fallthru
        _
      // Predicated region
      $region41: #{camera_module_forward.1} parent=11 // pred_check
        %p414 = pneg %p242
      $region42: #{camera_module_forward.1} parent=11 // pred_check_branch
        %416 = sbr.rel (%p414) target = $region44
      $region43: #{camera_module_forward.1} parent=11 // pred_region
        _
      $region44: #{camera_module_forward.1} parent=11 // pred_fallthru
        _
      // Predicated region
      $region45: #{camera_module_forward.1} parent=11 // pred_check
        %p417 = pneg %p263
      $region46: #{camera_module_forward.1} parent=11 // pred_check_branch
        %419 = sbr.rel (%p417) target = $region48
      $region47: #{camera_module_forward.1} parent=11 // pred_region
        _
      $region48: #{camera_module_forward.1} parent=11 // pred_fallthru
        _
      // Predicated region
      $region49: #{camera_module_forward.1} parent=11 // pred_check
        %p420 = pneg %p284
      $region50: #{camera_module_forward.1} parent=11 // pred_check_branch
        %422 = sbr.rel (%p420) target = $region52
      $region51: #{camera_module_forward.1} parent=11 // pred_region
        _
      $region52: #{camera_module_forward.1} parent=11 // pred_fallthru
        _
      // Predicated region
      $region53: #{camera_module_forward.1} parent=11 // pred_check
        %p423 = pneg %p305
      $region54: #{camera_module_forward.1} parent=11 // pred_check_branch
        %425 = sbr.rel (%p423) target = $region56
      $region55: #{camera_module_forward.1} parent=11 // pred_region
        _
      $region56: #{camera_module_forward.1} parent=11 // pred_fallthru
        _
      // Predicated region
      $region57: #{camera_module_forward.1} parent=11 // pred_check
        %p426 = pneg %p326
      $region58: #{camera_module_forward.1} parent=11 // pred_check_branch
        %428 = sbr.rel (%p426) target = $region60
      $region59: #{camera_module_forward.1} parent=11 // pred_region
        _
      $region60: #{camera_module_forward.1} parent=11 // pred_fallthru
        _
    $region12: #{camera_module_forward.1} parent=5 // pred_fallthru
      _
    %p429 = scmp.lt.s32.totalorder %s22, 4
    // Predicated region
    $region61: #{camera_module_forward.1} parent=5 // pred_check
      %p430 = pneg %p429
    $region62: #{camera_module_forward.1} parent=5 // pred_check_branch
      %432 = sbr.rel (%p430) target = $region64
    $region63: #{camera_module_forward.1} parent=5 // pred_region
      // Predicated region
      $region65: #{camera_module_forward.1} parent=63 // pred_check
        %p433 = pneg %p42
      $region66: #{camera_module_forward.1} parent=63 // pred_check_branch
        %435 = sbr.rel (%p433) target = $region68
      $region67: #{camera_module_forward.1} parent=63 // pred_region
        %p436 = scmp.lt.s32.totalorder %s22, 3
        %s437 = scalar_select %p436, %s22, 3
        %s438 = smul.addr %s437, 2
        %s439 = smul.addr %s438, 4
        %s440 = scalar_lea.vmem %s0, %s439
      $region68: #{camera_module_forward.1} parent=63 // pred_fallthru
        _
      // Predicated region
      $region69: #{camera_module_forward.1} parent=63 // pred_check
        %p441 = pneg %p68
      $region70: #{camera_module_forward.1} parent=63 // pred_check_branch
        %443 = sbr.rel (%p441) target = $region72
      $region71: #{camera_module_forward.1} parent=63 // pred_region
        %p444 = scmp.lt.s32.totalorder %s22, 3
        %s445 = scalar_select %p444, %s22, 3
        %s446 = smul.addr %s445, 2
        %s447 = scalar_lea.vmem %s1, %s446
      $region72: #{camera_module_forward.1} parent=63 // pred_fallthru
        _
    $region64: #{camera_module_forward.1} parent=5 // pred_fallthru
      _
    %p448 = scmp.le.s32.totalorder 1, %s22
    %p449 = scmp.lt.s32.totalorder %s22, 5
    %p450 = pnand %p448, %p449
    %p451 = pneg %p450
    // Predicated region
    $region73: #{camera_module_forward.1} parent=5 // pred_check
      _
    $region74: #{camera_module_forward.1} parent=5 // pred_check_branch
      %453 = sbr.rel (%p450) target = $region76
    $region75: #{camera_module_forward.1} parent=5 // pred_region
      %s454 = ssub.s32 %s22, 1
      %p455 = scmp.lt.s32.totalorder %s27, 3
      %s456 = scalar_select %p455, %s27, 3
      %s457 = smul.addr %s456, 2
      %s458 = smul.addr %s457, 4
      %s459 = scalar_lea.vmem %s0, %s458
      %p460 = pneg %p48
      %p461 = pneg %p45
      %p462 = scmp.lt.s32.totalorder %s27, 3
      %s463 = scalar_select %p462, %s27, 3
      %s464 = smul.addr %s463, 2
      %s465 = scalar_lea.vmem %s1, %s464
      %p466 = pneg %p74
      %p467 = pneg %p71
      %p468 = pneg %p95
      %p469 = pneg %p92
      %p470 = pneg %p116
      %p471 = pneg %p113
      %p472 = pneg %p137
      %p473 = pneg %p134
      %p474 = pneg %p158
      %p475 = pneg %p155
      %p476 = pneg %p179
      %p477 = pneg %p176
      %p478 = pneg %p200
      %p479 = pneg %p197
      %p480 = pneg %p221
      %p481 = pneg %p218
      %p482 = pneg %p242
      %p483 = pneg %p239
      %p484 = pneg %p263
      %p485 = pneg %p260
      %p486 = pneg %p284
      %p487 = pneg %p281
      %p488 = pneg %p305
      %p489 = pneg %p302
      %p490 = pneg %p326
      %p491 = pneg %p323
      %p492 = pneg %p352
      %p493 = pneg %p349
      %p494 = scmp.lt.s32.totalorder %s27, 3
      %s495 = scalar_select %p494, %s27, 3
      %s496 = smul.addr %s495, 6
      %s497 = smul.addr %s496, 8
      %s498 = scalar_lea.vmem %s14, %s497
      %p499 = pneg %p378
      %p500 = pneg %p375
      %p501 = scmp.lt.s32.totalorder %s27, 3
      %s502 = scalar_select %p501, %s27, 3
      %s503 = smul.addr %s502, 4
      %s504 = smul.addr %s503, 8
      %s505 = scalar_lea.vmem %s15, %s504
      %p506 = scmp.lt.s32.totalorder %s27, 3
      %s507 = scalar_select %p506, %s27, 3
      %s508 = smul.addr %s507, 2
      %s509 = smul.addr %s508, 4
      %s510 = scalar_lea.vmem %s0, %s509
      %p511 = scmp.lt.s32.totalorder %s27, 3
      %s512 = scalar_select %p511, %s27, 3
      %s513 = smul.addr %s512, 2
      %s514 = scalar_lea.vmem %s1, %s513
      %p515 = scmp.lt.s32.totalorder %s27, 3
      %s516 = scalar_select %p515, %s27, 3
      %s517 = smul.addr %s516, 6
      %s518 = smul.addr %s517, 8
      %s519 = scalar_lea.vmem %s14, %s518
      %p520 = scmp.lt.s32.totalorder %s27, 3
      %s521 = scalar_select %p520, %s27, 3
      %s522 = smul.addr %s521, 4
      %s523 = smul.addr %s522, 8
      %s524 = scalar_lea.vmem %s15, %s523
      %v526 = vld [vmem:[%s510] sm:$0x77]
      %v528 = vcombine.high %v526, %v526
      %v530 = vpack.c.bf16 %v526, %v526
      %v531 = vpack.c.bf16 %v528, %v528
      %v532 = vld [vmem:[%s2] sm:$0xf]
      %v533 = vld [vmem:[%s2 + $0x4] sm:$0xf]
      %v534 = vld [vmem:[%s3] sm:$0xff]
      %v535 = vld [vmem:[%s3 + $0x8] sm:$0xff]
      %537 = vset.pattern.permute.xlu0 0
      %538 = vperm.xlu0 %537, %v534
      %v539 = vpop.permute.xlu0 %538
      %542 = vset.pattern.permute.xlu0 0
      %543 = vperm.xlu0 %542, %v535
      %v544 = vpop.permute.xlu0 %543
      %v548 = vunpack.c.l.b16 %v532
      %v549 = vunpack.c.l.b16 %v533
      %v550 = vpack.c.b16 %v549, %v548
      %vm551 = vcmask 23552
      %v553 = vsel %vm551, %v550, 0
      %vm555 = vcmask 1040384
      %vm556 = vcmask 1041408
      %v557 = vsel %vm555, 4294967295, 65535
      %v558 = vsel %vm556, %v557, 0
      %v560 = vand.u32 %v530, %v558
      %v563 = vand.u32 %v531, %v558
      %565 = vmatprep.subr.bf16.mxu0 %v563
      %566 = vmatpush1.bf16.msra.mxu0 %v560
      %567 = vmatprep.subr.bf16.mxu0 0
      %568 = vmatpush1.bf16.msra.mxu0 0
      %569 = vmatprep.subr.bf16.mxu0 0
      %570 = vmatpush1.bf16.msra.mxu0 0
      %571 = vmatprep.subr.bf16.mxu0 0
      %572 = vmatpush1.bf16.msra.mxu0 0
      %573 = vmatprep.subr.bf16.mxu0 0
      %574 = vmatpush1.bf16.msra.mxu0 0
      %575 = vmatprep.subr.bf16.mxu0 0
      %576 = vmatpush1.bf16.msra.mxu0 0
      %577 = vmatprep.subr.bf16.mxu0 0
      %578 = vmatpush1.bf16.msra.mxu0 0
      %579 = vmatprep.subr.bf16.mxu0 0
      %580 = vmatpush1.bf16.msra.mxu0 0
      %581 = vmatprep.subr.bf16.mxu0 0
      %582 = vmatpush1.bf16.msra.mxu0 0
      %583 = vmatprep.subr.bf16.mxu0 0
      %584 = vmatpush1.bf16.msra.mxu0 0
      %585 = vmatprep.subr.bf16.mxu0 0
      %586 = vmatpush1.bf16.msra.mxu0 0
      %587 = vmatprep.subr.bf16.mxu0 0
      %588 = vmatpush1.bf16.msra.mxu0 0
      %589 = vmatprep.subr.bf16.mxu0 0
      %590 = vmatpush1.bf16.msra.mxu0 0
      %591 = vmatprep.subr.bf16.mxu0 0
      %592 = vmatpush1.bf16.msra.mxu0 0
      %593 = vmatprep.subr.bf16.mxu0 0
      %594 = vmatpush1.bf16.msra.mxu0 0
      %595 = vmatprep.subr.bf16.mxu0 0
      %596 = vmatpush1.bf16.msra.mxu0 0
      %597 = vmatprep.mubr.bf16.mxu0 0
      %598 = vmatmul.mubr.bf16.gmra.mrb[0].mxu0 %v553
      %v599 = vpop.f32.mrb[0].mxu0
      %v600 = vadd.f32 %v539, %v599
      %v601 = vpop.f32.mrb[0].mxu0
      %v602 = vadd.f32 %v539, %v601
      %v603 = vpop.f32.mrb[0].mxu0
      %v604 = vadd.f32 %v544, %v603
      %v605 = vpop.f32.mrb[0].mxu0
      %v606 = vadd.f32 %v544, %v605
      %607 = vdwg.mxu0
      %v608 = vmax.f32 %v600, 0.0
      %v609 = vmax.f32 %v602, 0.0
      %v610 = vmax.f32 %v604, 0.0
      %v611 = vmax.f32 %v606, 0.0
      %v612 = vld [vmem:[%s4] sm:$0xf]
      %v613 = vld [vmem:[%s4 + $0x4] sm:$0xf]
      %v614 = vld [vmem:[%s4 + $0x8] sm:$0xf]
      %v615 = vld [vmem:[%s4 + $0xc] sm:$0xf]
      %v616 = vpack.c.bf16 %v610, %v608
      %v617 = vpack.c.bf16 %v611, %v609
      %v618 = vld [vmem:[%s5] sm:$0xff]
      %v619 = vld [vmem:[%s5 + $0x8] sm:$0xff]
      %v620 = vld [vmem:[%s5 + $0x10] sm:$0xff]
      %v621 = vld [vmem:[%s5 + $0x18] sm:$0xff]
      %623 = vset.pattern.permute.xlu0 0
      %624 = vperm.xlu0 %623, %v618
      %v625 = vpop.permute.xlu0 %624
      %628 = vset.pattern.permute.xlu0 0
      %629 = vperm.xlu0 %628, %v619
      %v630 = vpop.permute.xlu0 %629
      %633 = vset.pattern.permute.xlu0 0
      %634 = vperm.xlu0 %633, %v620
      %v635 = vpop.permute.xlu0 %634
      %638 = vset.pattern.permute.xlu0 0
      %639 = vperm.xlu0 %638, %v621
      %v640 = vpop.permute.xlu0 %639
      %v646 = vunpack.c.l.b16 %v612
      %v647 = vunpack.c.l.b16 %v613
      %v648 = vunpack.c.l.b16 %v614
      %v649 = vunpack.c.l.b16 %v615
      %v650 = vpack.c.b16 %v647, %v646
      %v651 = vpack.c.b16 %v649, %v648
      %vm652 = vcmask 130048
      %v654 = vsel %vm652, %v650, 0
      %v657 = vsel %vm652, %v651, 0
      %659 = vmatprep.subr.bf16.mxu0 %v617
      %660 = vmatpush1.bf16.msra.mxu0 %v616
      %661 = vmatprep.subr.bf16.mxu0 0
      %662 = vmatpush1.bf16.msra.mxu0 0
      %663 = vmatprep.subr.bf16.mxu0 0
      %664 = vmatpush1.bf16.msra.mxu0 0
      %665 = vmatprep.subr.bf16.mxu0 0
      %666 = vmatpush1.bf16.msra.mxu0 0
      %667 = vmatprep.subr.bf16.mxu0 0
      %668 = vmatpush1.bf16.msra.mxu0 0
      %669 = vmatprep.subr.bf16.mxu0 0
      %670 = vmatpush1.bf16.msra.mxu0 0
      %671 = vmatprep.subr.bf16.mxu0 0
      %672 = vmatpush1.bf16.msra.mxu0 0
      %673 = vmatprep.subr.bf16.mxu0 0
      %674 = vmatpush1.bf16.msra.mxu0 0
      %675 = vmatprep.subr.bf16.mxu0 0
      %676 = vmatpush1.bf16.msra.mxu0 0
      %677 = vmatprep.subr.bf16.mxu0 0
      %678 = vmatpush1.bf16.msra.mxu0 0
      %679 = vmatprep.subr.bf16.mxu0 0
      %680 = vmatpush1.bf16.msra.mxu0 0
      %681 = vmatprep.subr.bf16.mxu0 0
      %682 = vmatpush1.bf16.msra.mxu0 0
      %683 = vmatprep.subr.bf16.mxu0 0
      %684 = vmatpush1.bf16.msra.mxu0 0
      %685 = vmatprep.subr.bf16.mxu0 0
      %686 = vmatpush1.bf16.msra.mxu0 0
      %687 = vmatprep.subr.bf16.mxu0 0
      %688 = vmatpush1.bf16.msra.mxu0 0
      %689 = vmatprep.subr.bf16.mxu0 0
      %690 = vmatpush1.bf16.msra.mxu0 0
      %691 = vmatprep.mubr.bf16.mxu0 0
      %692 = vmatmul.mubr.bf16.gmra.mrb[0].mxu0 %v654
      %v693 = vpop.f32.mrb[0].mxu0
      %v694 = vadd.f32 %v625, %v693
      %v695 = vpop.f32.mrb[0].mxu0
      %v696 = vadd.f32 %v625, %v695
      %v697 = vpop.f32.mrb[0].mxu0
      %v698 = vadd.f32 %v630, %v697
      %v699 = vpop.f32.mrb[0].mxu0
      %v700 = vadd.f32 %v630, %v699
      %701 = vmatprep.mubr.bf16.mxu0 0
      %702 = vmatmul.mubr.bf16.gmra.mrb[0].mxu0 %v657
      %v703 = vpop.f32.mrb[0].mxu0
      %v704 = vadd.f32 %v635, %v703
      %v705 = vpop.f32.mrb[0].mxu0
      %v706 = vadd.f32 %v635, %v705
      %v707 = vpop.f32.mrb[0].mxu0
      %v708 = vadd.f32 %v640, %v707
      %v709 = vpop.f32.mrb[0].mxu0
      %v710 = vadd.f32 %v640, %v709
      %711 = vdwg.mxu0
      %v712 = vld [vmem:[%s514] sm:$0x3]
      %v713 = vld [vmem:[%s6] sm:$0xff]
      %715 = vset.pattern.permute.xlu0 0
      %716 = vperm.xlu0 %715, %v713
      %v717 = vpop.permute.xlu0 %716
      %v720 = vlaneseq
      %v721 = vshrl.u32 %v720, 7
      %v722 = vsub.s32 0, %v721
      %v723 = vrot.slane %v712, %v722
      %v724 = vlaneseq
      %v725 = vshrl.u32 %v724, 7
      %v726 = vsub.s32 1, %v725
      %v727 = vrot.slane %v712, %v726
      %v730 = vmul.f32 %v717, %v723
      %v731 = vmul.f32 %v717, %v727
      %v732 = vld [vmem:[%s7] sm:$0xff]
      %734 = vset.pattern.permute.xlu0 0
      %735 = vperm.xlu0 %734, %v732
      %v736 = vpop.permute.xlu0 %735
      %v738 = vadd.f32 %v730, %v736
      %v739 = vadd.f32 %v731, %v736
      %v740 = vmax.f32 %v738, 0.0
      %v741 = vmax.f32 %v739, 0.0
      %v742 = vpack.c.bf16 %v740, %v740
      %v743 = vpack.c.bf16 %v741, %v741
      %v744 = vpack.c.bf16 %v698, %v694
      %v745 = vpack.c.bf16 %v700, %v696
      %v746 = vpack.c.bf16 %v708, %v704
      %v747 = vpack.c.bf16 %v710, %v706
      %v748 = vld [vmem:[%s8] sm:$0xf]
      %v749 = vld [vmem:[%s8 + $0x4] sm:$0xf]
      %v750 = vld [vmem:[%s9] sm:$0xf]
      %v751 = vld [vmem:[%s9 + $0x4] sm:$0xf]
      %v754 = vunpack.c.l.b16 %v750
      %v755 = vunpack.c.l.b16 %v751
      %v756 = vpack.c.b16 %v755, %v754
      %vm757 = vcmask 261120
      %v759 = vsel %vm757, %v756, 0
      %761 = vmatprep.subr.bf16.mxu0 %v745
      %762 = vmatpush1.bf16.msra.mxu0 %v744
      %763 = vmatprep.subr.bf16.mxu0 %v747
      %764 = vmatpush1.bf16.msra.mxu0 %v746
      %765 = vmatprep.subr.bf16.mxu0 0
      %766 = vmatpush1.bf16.msra.mxu0 0
      %767 = vmatprep.subr.bf16.mxu0 0
      %768 = vmatpush1.bf16.msra.mxu0 0
      %769 = vmatprep.subr.bf16.mxu0 0
      %770 = vmatpush1.bf16.msra.mxu0 0
      %771 = vmatprep.subr.bf16.mxu0 0
      %772 = vmatpush1.bf16.msra.mxu0 0
      %773 = vmatprep.subr.bf16.mxu0 0
      %774 = vmatpush1.bf16.msra.mxu0 0
      %775 = vmatprep.subr.bf16.mxu0 0
      %776 = vmatpush1.bf16.msra.mxu0 0
      %777 = vmatprep.subr.bf16.mxu0 0
      %778 = vmatpush1.bf16.msra.mxu0 0
      %779 = vmatprep.subr.bf16.mxu0 0
      %780 = vmatpush1.bf16.msra.mxu0 0
      %781 = vmatprep.subr.bf16.mxu0 0
      %782 = vmatpush1.bf16.msra.mxu0 0
      %783 = vmatprep.subr.bf16.mxu0 0
      %784 = vmatpush1.bf16.msra.mxu0 0
      %785 = vmatprep.subr.bf16.mxu0 0
      %786 = vmatpush1.bf16.msra.mxu0 0
      %787 = vmatprep.subr.bf16.mxu0 0
      %788 = vmatpush1.bf16.msra.mxu0 0
      %789 = vmatprep.subr.bf16.mxu0 0
      %790 = vmatpush1.bf16.msra.mxu0 0
      %791 = vmatprep.subr.bf16.mxu0 0
      %792 = vmatpush1.bf16.msra.mxu0 0
      %793 = vmatprep.mubr.bf16.mxu0 0
      %794 = vmatmul.mubr.bf16.gmra.mrb[0].mxu0 %v759
      %v795 = vpop.f32.mrb[0].mxu0
      %v796 = vadd.f32 0.0, %v795
      %v797 = vpop.f32.mrb[0].mxu0
      %v798 = vadd.f32 0.0, %v797
      %v799 = vpop.f32.mrb[0].mxu0
      %v800 = vadd.f32 0.0, %v799
      %v801 = vpop.f32.mrb[0].mxu0
      %v802 = vadd.f32 0.0, %v801
      %803 = vdwg.mxu0
      %v806 = vunpack.c.l.b16 %v748
      %v807 = vunpack.c.l.b16 %v749
      %v808 = vpack.c.b16 %v807, %v806
      %vm809 = vcmask 64512
      %v811 = vsel %vm809, %v808, 0
      %vm813 = vcmask 1043456
      %v815 = vsel %vm813, %v742, 0
      %v818 = vsel %vm813, %v743, 0
      %820 = vmatprep.subr.bf16.mxu0 %v818
      %821 = vmatpush1.bf16.msra.mxu0 %v815
      %822 = vmatprep.subr.bf16.mxu0 0
      %823 = vmatpush1.bf16.msra.mxu0 0
      %824 = vmatprep.subr.bf16.mxu0 0
      %825 = vmatpush1.bf16.msra.mxu0 0
      %826 = vmatprep.subr.bf16.mxu0 0
      %827 = vmatpush1.bf16.msra.mxu0 0
      %828 = vmatprep.subr.bf16.mxu0 0
      %829 = vmatpush1.bf16.msra.mxu0 0
      %830 = vmatprep.subr.bf16.mxu0 0
      %831 = vmatpush1.bf16.msra.mxu0 0
      %832 = vmatprep.subr.bf16.mxu0 0
      %833 = vmatpush1.bf16.msra.mxu0 0
      %834 = vmatprep.subr.bf16.mxu0 0
      %835 = vmatpush1.bf16.msra.mxu0 0
      %836 = vmatprep.subr.bf16.mxu0 0
      %837 = vmatpush1.bf16.msra.mxu0 0
      %838 = vmatprep.subr.bf16.mxu0 0
      %839 = vmatpush1.bf16.msra.mxu0 0
      %840 = vmatprep.subr.bf16.mxu0 0
      %841 = vmatpush1.bf16.msra.mxu0 0
      %842 = vmatprep.subr.bf16.mxu0 0
      %843 = vmatpush1.bf16.msra.mxu0 0
      %844 = vmatprep.subr.bf16.mxu0 0
      %845 = vmatpush1.bf16.msra.mxu0 0
      %846 = vmatprep.subr.bf16.mxu0 0
      %847 = vmatpush1.bf16.msra.mxu0 0
      %848 = vmatprep.subr.bf16.mxu0 0
      %849 = vmatpush1.bf16.msra.mxu0 0
      %850 = vmatprep.subr.bf16.mxu0 0
      %851 = vmatpush1.bf16.msra.mxu0 0
      %852 = vmatprep.mubr.bf16.mxu0 0
      %853 = vmatmul.mubr.bf16.gmra.mrb[0].mxu0 %v811
      %v854 = vpop.f32.mrb[0].mxu0
      %v855 = vadd.f32 %v796, %v854
      %v856 = vpop.f32.mrb[0].mxu0
      %v857 = vadd.f32 %v798, %v856
      %v858 = vpop.f32.mrb[0].mxu0
      %v859 = vadd.f32 %v800, %v858
      %v860 = vpop.f32.mrb[0].mxu0
      %v861 = vadd.f32 %v802, %v860
      %862 = vdwg.mxu0
      %v863 = vld [vmem:[%s10] sm:$0xff]
      %v864 = vld [vmem:[%s10 + $0x8] sm:$0xff]
      %866 = vset.pattern.permute.xlu0 0
      %867 = vperm.xlu0 %866, %v863
      %v868 = vpop.permute.xlu0 %867
      %871 = vset.pattern.permute.xlu0 0
      %872 = vperm.xlu0 %871, %v864
      %v873 = vpop.permute.xlu0 %872
      %v875 = vadd.f32 %v855, %v868
      %v876 = vadd.f32 %v857, %v868
      %v877 = vadd.f32 %v859, %v873
      %v878 = vadd.f32 %v861, %v873
      %v879 = vld [vmem:[%s11] sm:$0xf]
      %v880 = vld [vmem:[%s11 + $0x4] sm:$0xf]
      %v881 = vld [vmem:[%s11 + $0x8] sm:$0xf]
      %v882 = vld [vmem:[%s12] sm:$0xf]
      %v883 = vld [vmem:[%s12 + $0x4] sm:$0xf]
      %v884 = vld [vmem:[%s12 + $0x8] sm:$0xf]
      %v888 = vunpack.c.l.b16 %v882
      %v889 = vunpack.c.l.b16 %v883
      %v890 = vunpack.c.l.b16 %v884
      %v891 = vpack.c.b16 %v889, %v888
      %v892 = vpack.c.b16 %v890, %v890
      %v894 = vsel %vm757, %v891, 0
      %v897 = vsel %vm757, %v892, 0
      %899 = vmatprep.subr.bf16.mxu0 %v745
      %900 = vmatpush1.bf16.msra.mxu0 %v744
      %901 = vmatprep.subr.bf16.mxu0 %v747
      %902 = vmatpush1.bf16.msra.mxu0 %v746
      %903 = vmatprep.subr.bf16.mxu0 0
      %904 = vmatpush1.bf16.msra.mxu0 0
      %905 = vmatprep.subr.bf16.mxu0 0
      %906 = vmatpush1.bf16.msra.mxu0 0
      %907 = vmatprep.subr.bf16.mxu0 0
      %908 = vmatpush1.bf16.msra.mxu0 0
      %909 = vmatprep.subr.bf16.mxu0 0
      %910 = vmatpush1.bf16.msra.mxu0 0
      %911 = vmatprep.subr.bf16.mxu0 0
      %912 = vmatpush1.bf16.msra.mxu0 0
      %913 = vmatprep.subr.bf16.mxu0 0
      %914 = vmatpush1.bf16.msra.mxu0 0
      %915 = vmatprep.subr.bf16.mxu0 0
      %916 = vmatpush1.bf16.msra.mxu0 0
      %917 = vmatprep.subr.bf16.mxu0 0
      %918 = vmatpush1.bf16.msra.mxu0 0
      %919 = vmatprep.subr.bf16.mxu0 0
      %920 = vmatpush1.bf16.msra.mxu0 0
      %921 = vmatprep.subr.bf16.mxu0 0
      %922 = vmatpush1.bf16.msra.mxu0 0
      %923 = vmatprep.subr.bf16.mxu0 0
      %924 = vmatpush1.bf16.msra.mxu0 0
      %925 = vmatprep.subr.bf16.mxu0 0
      %926 = vmatpush1.bf16.msra.mxu0 0
      %927 = vmatprep.subr.bf16.mxu0 0
      %928 = vmatpush1.bf16.msra.mxu0 0
      %929 = vmatprep.subr.bf16.mxu0 0
      %930 = vmatpush1.bf16.msra.mxu0 0
      %931 = vmatprep.mubr.bf16.mxu0 0
      %932 = vmatmul.mubr.bf16.gmra.mrb[0].mxu0 %v894
      %v933 = vpop.f32.mrb[0].mxu0
      %v934 = vadd.f32 0.0, %v933
      %v935 = vpop.f32.mrb[0].mxu0
      %v936 = vadd.f32 0.0, %v935
      %v937 = vpop.f32.mrb[0].mxu0
      %v938 = vadd.f32 0.0, %v937
      %v939 = vpop.f32.mrb[0].mxu0
      %v940 = vadd.f32 0.0, %v939
      %941 = vmatprep.mubr.bf16.mxu0 0
      %942 = vmatmul.mubr.bf16.gmra.mrb[0].mxu0 %v897
      %v943 = vpop.f32.mrb[0].mxu0
      %v944 = vadd.f32 0.0, %v943
      %v945 = vpop.f32.mrb[0].mxu0
      %v946 = vadd.f32 0.0, %v945
      %v947 = vpop.f32.mrb[0].mxu0
      %v948 = vpop.f32.mrb[0].mxu0
      %949 = vdwg.mxu0
      %v953 = vunpack.c.l.b16 %v879
      %v954 = vunpack.c.l.b16 %v880
      %v955 = vunpack.c.l.b16 %v881
      %v956 = vpack.c.b16 %v954, %v953
      %v957 = vpack.c.b16 %v955, %v955
      %v959 = vsel %vm809, %v956, 0
      %v962 = vsel %vm809, %v957, 0
      %964 = vmatprep.subr.bf16.mxu0 %v818
      %965 = vmatpush1.bf16.msra.mxu0 %v815
      %966 = vmatprep.subr.bf16.mxu0 0
      %967 = vmatpush1.bf16.msra.mxu0 0
      %968 = vmatprep.subr.bf16.mxu0 0
      %969 = vmatpush1.bf16.msra.mxu0 0
      %970 = vmatprep.subr.bf16.mxu0 0
      %971 = vmatpush1.bf16.msra.mxu0 0
      %972 = vmatprep.subr.bf16.mxu0 0
      %973 = vmatpush1.bf16.msra.mxu0 0
      %974 = vmatprep.subr.bf16.mxu0 0
      %975 = vmatpush1.bf16.msra.mxu0 0
      %976 = vmatprep.subr.bf16.mxu0 0
      %977 = vmatpush1.bf16.msra.mxu0 0
      %978 = vmatprep.subr.bf16.mxu0 0
      %979 = vmatpush1.bf16.msra.mxu0 0
      %980 = vmatprep.subr.bf16.mxu0 0
      %981 = vmatpush1.bf16.msra.mxu0 0
      %982 = vmatprep.subr.bf16.mxu0 0
      %983 = vmatpush1.bf16.msra.mxu0 0
      %984 = vmatprep.subr.bf16.mxu0 0
      %985 = vmatpush1.bf16.msra.mxu0 0
      %986 = vmatprep.subr.bf16.mxu0 0
      %987 = vmatpush1.bf16.msra.mxu0 0
      %988 = vmatprep.subr.bf16.mxu0 0
      %989 = vmatpush1.bf16.msra.mxu0 0
      %990 = vmatprep.subr.bf16.mxu0 0
      %991 = vmatpush1.bf16.msra.mxu0 0
      %992 = vmatprep.subr.bf16.mxu0 0
      %993 = vmatpush1.bf16.msra.mxu0 0
      %994 = vmatprep.subr.bf16.mxu0 0
      %995 = vmatpush1.bf16.msra.mxu0 0
      %996 = vmatprep.mubr.bf16.mxu0 0
      %997 = vmatmul.mubr.bf16.gmra.mrb[0].mxu0 %v959
      %v998 = vpop.f32.mrb[0].mxu0
      %v999 = vadd.f32 %v934, %v998
      %v1000 = vpop.f32.mrb[0].mxu0
      %v1001 = vadd.f32 %v936, %v1000
      %v1002 = vpop.f32.mrb[0].mxu0
      %v1003 = vadd.f32 %v938, %v1002
      %v1004 = vpop.f32.mrb[0].mxu0
      %v1005 = vadd.f32 %v940, %v1004
      %1006 = vmatprep.mubr.bf16.mxu0 0
      %1007 = vmatmul.mubr.bf16.gmra.mrb[0].mxu0 %v962
      %v1008 = vpop.f32.mrb[0].mxu0
      %v1009 = vadd.f32 %v944, %v1008
      %v1010 = vpop.f32.mrb[0].mxu0
      %v1011 = vadd.f32 %v946, %v1010
      %v1012 = vpop.f32.mrb[0].mxu0
      %v1013 = vpop.f32.mrb[0].mxu0
      %1014 = vdwg.mxu0
      %v1015 = vld [vmem:[%s13] sm:$0xff]
      %v1016 = vld [vmem:[%s13 + $0x8] sm:$0xff]
      %v1017 = vld [vmem:[%s13 + $0x10] sm:$0xff]
      %1019 = vset.pattern.permute.xlu0 0
      %1020 = vperm.xlu0 %1019, %v1015
      %v1021 = vpop.permute.xlu0 %1020
      %1024 = vset.pattern.permute.xlu0 0
      %1025 = vperm.xlu0 %1024, %v1016
      %v1026 = vpop.permute.xlu0 %1025
      %1029 = vset.pattern.permute.xlu0 0
      %1030 = vperm.xlu0 %1029, %v1017
      %v1031 = vpop.permute.xlu0 %1030
      %v1033 = vadd.f32 %v999, %v1021
      %v1034 = vadd.f32 %v1001, %v1021
      %v1035 = vadd.f32 %v1003, %v1026
      %v1036 = vadd.f32 %v1005, %v1026
      %v1037 = vadd.f32 %v1009, %v1031
      %v1038 = vadd.f32 %v1011, %v1031
      %v1039 = vmax.f32 %v875, %v877
      %v1040 = vrot.slane %v1039, 4
      %v1041 = vmax.f32 %v1039, %v1040
      %v1042 = vrot.slane %v1041, 2
      %v1043 = vmax.f32 %v1041, %v1042
      %v1044 = vrot.slane %v1043, 1
      %v1045 = vmax.f32 %v1043, %v1044
      %v1046 = vmax.f32 %v876, %v878
      %v1047 = vrot.slane %v1046, 4
      %v1048 = vmax.f32 %v1046, %v1047
      %v1049 = vrot.slane %v1048, 2
      %v1050 = vmax.f32 %v1048, %v1049
      %v1051 = vrot.slane %v1050, 1
      %v1052 = vmax.f32 %v1050, %v1051
      %v1053 = vsub.f32 %v875, %v1045
      %v1054 = vsub.f32 %v876, %v1052
      %v1055 = vsub.f32 %v877, %v1045
      %v1056 = vsub.f32 %v878, %v1052
      %v1057 = vmul.f32 %v1053, 1.442695
      %v1058 = vpow.pop %v1057
      %v1059 = vmul.f32 %v1054, 1.442695
      %v1060 = vpow.pop %v1059
      %v1061 = vmul.f32 %v1055, 1.442695
      %v1062 = vpow.pop %v1061
      %v1063 = vmul.f32 %v1056, 1.442695
      %v1064 = vpow.pop %v1063
      %v1065 = vadd.f32 %v1058, %v1062
      %v1066 = vrot.slane %v1065, 4
      %v1067 = vadd.f32 %v1065, %v1066
      %v1068 = vrot.slane %v1067, 2
      %v1069 = vadd.f32 %v1067, %v1068
      %v1070 = vrot.slane %v1069, 1
      %v1071 = vadd.f32 %v1069, %v1070
      %v1072 = vadd.f32 %v1060, %v1064
      %v1073 = vrot.slane %v1072, 4
      %v1074 = vadd.f32 %v1072, %v1073
      %v1075 = vrot.slane %v1074, 2
      %v1076 = vadd.f32 %v1074, %v1075
      %v1077 = vrot.slane %v1076, 1
      %v1078 = vadd.f32 %v1076, %v1077
      %v1079 = vrcp.pop %v1071
      %v1080 = vmul.f32 %v1058, %v1079
      %v1081 = vrcp.pop %v1078
      %v1082 = vmul.f32 %v1060, %v1081
      %v1083 = vmul.f32 %v1062, %v1079
      %v1084 = vmul.f32 %v1064, %v1081
      %1085 = vst [vmem:[%s524] sm:$0xff] %v1080
      %1086 = vst [vmem:[%s524 + $0x8] sm:$0xff] %v1082
      %1087 = vst [vmem:[%s524 + $0x10] sm:$0xff] %v1083
      %1088 = vst [vmem:[%s524 + $0x18] sm:$0xff] %v1084
      %1089 = vst [vmem:[%s519] sm:$0xff] %v1033
      %1090 = vst [vmem:[%s519 + $0x8] sm:$0xff] %v1034
      %1091 = vst [vmem:[%s519 + $0x10] sm:$0xff] %v1035
      %1092 = vst [vmem:[%s519 + $0x18] sm:$0xff] %v1036
      %1093 = vst [vmem:[%s519 + $0x20] sm:$0xff] %v1037
      %1094 = vst [vmem:[%s519 + $0x28] sm:$0xff] %v1038
      %p1095 = scmp.lt.s32.totalorder %s27, 3
      %s1096 = scalar_select %p1095, %s27, 3
      %s1097 = smul.addr %s1096, 6
      %s1098 = smul.addr %s1097, 8
      %s1099 = scalar_lea.vmem %s14, %s1098
      %p1100 = scmp.lt.s32.totalorder %s27, 3
      %s1101 = scalar_select %p1100, %s27, 3
      %s1102 = smul.addr %s1101, 4
      %s1103 = smul.addr %s1102, 8
      %s1104 = scalar_lea.vmem %s15, %s1103
      // Predicated region
      $region77: #{camera_module_forward.1} parent=75 // pred_check
        %p1105 = pneg %p349
      $region78: #{camera_module_forward.1} parent=75 // pred_check_branch
        %1107 = sbr.rel (%p1105) target = $region80
      $region79: #{camera_module_forward.1} parent=75 // pred_region
        _
      $region80: #{camera_module_forward.1} parent=75 // pred_fallthru
        _
      // Predicated region
      $region81: #{camera_module_forward.1} parent=75 // pred_check
        %p1108 = pneg %p375
      $region82: #{camera_module_forward.1} parent=75 // pred_check_branch
        %1110 = sbr.rel (%p1108) target = $region84
      $region83: #{camera_module_forward.1} parent=75 // pred_region
        _
      $region84: #{camera_module_forward.1} parent=75 // pred_fallthru
        _
    $region76: #{camera_module_forward.1} parent=5 // pred_fallthru
      _
    %p1111 = scmp.le.s32.totalorder 2, %s22
    // Predicated region
    $region85: #{camera_module_forward.1} parent=5 // pred_check
      %p1112 = pneg %p1111
    $region86: #{camera_module_forward.1} parent=5 // pred_check_branch
      %1114 = sbr.rel (%p1112) target = $region88
    $region87: #{camera_module_forward.1} parent=5 // pred_region
      %s1115 = ssub.s32 %s22, 2
      // Predicated region
      $region89: #{camera_module_forward.1} parent=87 // pred_check
        %p1116 = pneg %p355
      $region90: #{camera_module_forward.1} parent=87 // pred_check_branch
        %1118 = sbr.rel (%p1116) target = $region92
      $region91: #{camera_module_forward.1} parent=87 // pred_region
        %p1119 = scmp.lt.s32.totalorder %s28, 3
        %s1120 = scalar_select %p1119, %s28, 3
        %s1121 = smul.addr %s1120, 6
        %s1122 = smul.addr %s1121, 8
        %s1123 = scalar_lea.vmem %s14, %s1122
      $region92: #{camera_module_forward.1} parent=87 // pred_fallthru
        _
      // Predicated region
      $region93: #{camera_module_forward.1} parent=87 // pred_check
        %p1124 = pneg %p381
      $region94: #{camera_module_forward.1} parent=87 // pred_check_branch
        %1126 = sbr.rel (%p1124) target = $region96
      $region95: #{camera_module_forward.1} parent=87 // pred_region
        %p1127 = scmp.lt.s32.totalorder %s28, 3
        %s1128 = scalar_select %p1127, %s28, 3
        %s1129 = smul.addr %s1128, 4
        %s1130 = smul.addr %s1129, 8
        %s1131 = scalar_lea.vmem %s15, %s1130
      $region96: #{camera_module_forward.1} parent=87 // pred_fallthru
        _
    $region88: #{camera_module_forward.1} parent=5 // pred_fallthru
      _
  $region6: #{camera_module_forward.1} parent=0 // loop_footer
    %s26 = sadd.s32 1, %s22
  $region7: #{camera_module_forward.1} parent=0 // loop_footer_branch
    %21 = sbr.rel target = $region3
  $region8: #{camera_module_forward.1} parent=0 // loop_exit
    _

</llo_original>
